<compile_context>
chip_gen: v7x
topology: tpu7x:2x2x1
jax: 0.10.0
libtpu: 0.0.40
codegen_flags: <defaults>
</compile_context>

<pallas_src>
import copy
import itertools
import math

import numpy as np
import jax
import jax.numpy as jnp
from jax.experimental import pallas as pl
from jax.experimental.pallas import tpu as pltpu

LANE = 128
SUBLANE = 16  # multiple-of-16 row tiles keep bf16 (16, 128) packing happy


def _round_up(x, m):
    return ((x + m - 1) // m) * m


# ----------------------------- Pallas kernel ------------------------------ #
def _tmp_kernel(g_ref, s_ref, o_ref):
    """One T-tile: sum over combo slots of per-combo feature products.

    g_ref: (M-1, R, t_tile, D)  combo-member features; slot 0 already carries
                                the combo weight (0 for padded slots)   (bf16/f32)
    s_ref: (t_tile, D)          self-feature fallback, pre-masked by (1-H) (f32)
    o_ref: (t_tile, D)          output                                    (f32)
    """
    mm1, R, t_tile, D = g_ref.shape
    acc = jnp.zeros((t_tile, D), dtype=jnp.float32)
    # Static unroll over combo slots; R is small (combos of <= M-1 neighbors).
    # For very large R this should become an R grid axis / fori_loop with a
    # VMEM accumulator (pl.when init/finalize); unnecessary at these sizes.
    for r in range(R):
        p = g_ref[0, r, :, :].astype(jnp.float32)          # contiguous (t_tile, D)
        for m in range(1, mm1):
            p = p * g_ref[m, r, :, :].astype(jnp.float32)
        acc = acc + p
    o_ref[...] = (acc + s_ref[...].astype(jnp.float32)).astype(o_ref.dtype)


# ----------------------------- tiling helpers ------------------------------ #
def _block_vmem_bytes(t_tile, R, mm1, d_pad, g_bytes):
    g = mm1 * R * t_tile * d_pad * g_bytes
    s = t_tile * d_pad * 4
    o = t_tile * d_pad * 4
    return g + s + o


def _physical_vmem_bytes():
    try:
        info = pltpu.get_tpu_info()
        v = getattr(info, "vmem_capacity_bytes", None)
        if v:
            return int(v)
    except Exception:
        pass
    return 64 << 20  # conservative: v7x per-TensorCore VMEM


def _choose_t_tile(requested, t_pad, R, mm1, d_pad, g_bytes, budget_bytes):
    """Largest SUBLANE-multiple divisor of t_pad that fits the VMEM budget,
    preferring >= 2 grid steps so the 'parallel' axis can use both v7x TCs."""
    cands = [t for t in range(SUBLANE, t_pad + 1, SUBLANE) if t_pad % t == 0]
    ok = [t for t in cands
          if t <= max(SUBLANE, requested)
          and 2 * _block_vmem_bytes(t, R, mm1, d_pad, g_bytes) <= budget_bytes]
    if not ok:
        ok = [SUBLANE]
    tt = max(ok)
    if t_pad // tt == 1:
        smaller = [t for t in ok if t < tt and t_pad // t >= 2]
        if smaller:
            tt = max(smaller)
    return tt


# ------------------------- host-side glue (exact PyTorch math) ------------- #
def adj_coef(c, node, structure, M):
    alpha = 0
    for i in range(c):
        alpha += (-1) ** i * math.comb(c, i) * (c - i) ** M
    a = c / alpha
    degree = len(structure[int(node)])
    return a / degree


def build_combo_tables(targets, structure, M):
    """Flatten the hypergraph combinatorics into padded (index, weight) rows."""
    per_target_idx, per_target_w, has_edges = [], [], []
    for t in targets:
        edges = structure[int(t)]
        idxs, ws = [], []
        for edge in edges:
            c = len(edge)
            coef = adj_coef(c, t, structure, M)
            if c == M:
                tmp_edge = edge.copy()
                tmp_edge.remove(t)
                idxs.append(tuple(tmp_edge))
                ws.append(coef * math.factorial(c - 1))
            elif c < M:
                all_comb = [list(x) for x in itertools.combinations_with_replacement(edge, M)]
                val_comb = [cb for cb in all_comb if set(cb) == set(edge)]
                tmp_comb = copy.deepcopy(val_comb)
                for cb in tmp_comb:
                    cb.remove(t)
                for cb in tmp_comb:
                    num_perms = len(set(itertools.permutations(cb)))
                    idxs.append(tuple(cb))
                    ws.append(coef * num_perms)
            # c > M is not handled by the reference module either.
        has_edges.append(1.0 if edges else 0.0)
        per_target_idx.append(idxs)
        per_target_w.append(ws)

    T = len(targets)
    R = max(1, max(len(r) for r in per_target_idx))
    idx_arr = np.zeros((T, R, M - 1), dtype=np.int32)   # padded rows -> node 0
    w_arr = np.zeros((T, R), dtype=np.float32)          # padded rows -> weight 0
    for ti, (idxs, ws) in enumerate(zip(per_target_idx, per_target_w)):
        for ri, (ii, ww) in enumerate(zip(idxs, ws)):
            idx_arr[ti, ri, :] = np.asarray(ii, dtype=np.int32)
            w_arr[ti, ri] = ww
    return idx_arr, w_arr, np.asarray(has_edges, dtype=np.float32).reshape(T, 1)


# --------------------------- forward (module equivalent) ------------------- #
def tmessage_passing_forward(feats, targets, structure, M, *, t_tile=1024,
                             stream_dtype=jnp.bfloat16):
    """JAX/Pallas equivalent of TMessagePassing.forward(target_nodes)."""
    feats = jnp.asarray(feats, dtype=jnp.float32)
    N, D = feats.shape
    idx_arr, w_arr, h_arr = build_combo_tables(targets, structure, M)
    T, R, mm1 = idx_arr.shape

    d_pad = _round_up(D, LANE)
    g_bytes = jnp.dtype(stream_dtype).itemsize
    t_pad = _round_up(T, SUBLANE)

    phys_vmem = _physical_vmem_bytes()
    budget = (24 << 20) if phys_vmem <= (64 << 20) else (48 << 20)
    tt = _choose_t_tile(t_tile, t_pad, R, mm1, d_pad, g_bytes, budget)

    # Gather member features into (M-1, R, T, D): minor dims stay (T, D).
    # Slot 0 is gathered in f32 so the combo weight (incl. factorial /
    # permutation counts) is folded in BEFORE the bf16 cast; padded slots get
    # weight 0, which also zeroes their whole product.  Remaining slots are
    # gathered straight from a stream_dtype copy of feats (halves pre-kernel
    # HBM traffic for G).
    idx_mrt = np.transpose(idx_arr, (2, 1, 0))                          # (M-1, R, T)
    W_rt = jnp.asarray(np.transpose(w_arr))[..., None]                  # (R, T, 1) f32
    g0 = jnp.take(feats, jnp.asarray(idx_mrt[0].reshape(-1)), axis=0)
    g0 = (g0.reshape(R, T, D) * W_rt).astype(stream_dtype)              # (R, T, D)
    if mm1 > 1:
        feats_sd = feats.astype(stream_dtype)
        grest = jnp.take(feats_sd, jnp.asarray(idx_mrt[1:].reshape(-1)), axis=0)
        grest = grest.reshape(mm1 - 1, R, T, D)
        G = jnp.concatenate([g0[None], grest], axis=0)                  # (M-1, R, T, D)
    else:
        G = g0[None]

    # Self-feature fallback, kept in f32 (bit-exact for edge-less targets) and
    # pre-masked by (1 - H) so the kernel can just add it.
    S = jnp.take(feats, jnp.asarray(targets, dtype=jnp.int32), axis=0)  # (T, D) f32
    S = S * (1.0 - jnp.asarray(h_arr))                                  # (T, 1)

    # Pad T only to the sublane granularity and D to 128 lanes (zero rows).
    G = jnp.pad(G, ((0, 0), (0, 0), (0, t_pad - T), (0, d_pad - D)))
    S = jnp.pad(S, ((0, t_pad - T), (0, d_pad - D)))

    grid = (t_pad // tt,)
    vmem_need = 2 * _block_vmem_bytes(tt, R, mm1, d_pad, g_bytes) + (4 << 20)
    vmem_cap = min(phys_vmem - (8 << 20), 112 << 20)   # ~56 MiB on v7x, 112 MiB on v5e/v6e
    vmem_limit = int(min(max(32 << 20, vmem_need), vmem_cap))

    out = pl.pallas_call(
        _tmp_kernel,
        out_shape=jax.ShapeDtypeStruct((t_pad, d_pad), jnp.float32),
        grid_spec=pltpu.PrefetchScalarGridSpec(
            num_scalar_prefetch=0,
            grid=grid,
            in_specs=[
                pl.BlockSpec((mm1, R, tt, d_pad), lambda i: (0, 0, i, 0)),
                pl.BlockSpec((tt, d_pad), lambda i: (i, 0)),
            ],
            out_specs=pl.BlockSpec((tt, d_pad), lambda i: (i, 0)),
        ),
        compiler_params=pltpu.CompilerParams(
            dimension_semantics=("parallel",),
            vmem_limit_bytes=vmem_limit,
        ),
    )(G, S)
    return out[:T, :D]


# ------------------------- numpy reference (PyTorch transcription) --------- #
def reference_forward(targets, structure, f_np, M):
    outs = []
    for t in targets:
        edges = structure[int(t)]
        if not edges:
            outs.append(f_np[t].copy())
            continue
        acc = np.zeros_like(f_np[t])
        for edge in edges:
            c = len(edge)
            coef = adj_coef(c, t, structure, M)
            if c == M:
                tmp = edge.copy()
                tmp.remove(t)
                acc += coef * math.factorial(c - 1) * np.prod(f_np[np.asarray(tmp)], axis=0)
            elif c < M:
                all_comb = [list(x) for x in itertools.combinations_with_replacement(edge, M)]
                val_comb = [cb for cb in all_comb if set(cb) == set(edge)]
                tmp_comb = copy.deepcopy(val_comb)
                for cb in tmp_comb:
                    cb.remove(t)
                num_perms = np.asarray(
                    [len(set(itertools.permutations(cb))) for cb in tmp_comb], dtype=np.float32)
                hos = np.stack([np.prod(f_np[np.asarray(cb)], axis=0) for cb in tmp_comb])
                acc += coef * (num_perms @ hos)
        outs.append(acc)
    return np.stack(outs, axis=0)


# ---------------------------------- main ----------------------------------- #
if __name__ == "__main__":
    M = 3            # max hyperedge cardinality
    N, D = 12, 128   # number of nodes, feature dim (lane-dense D)

    key = jax.random.PRNGKey(0)
    feats = jax.random.normal(key, (N, D), dtype=jnp.float32)
    f_np = np.asarray(feats)

    # Small deterministic hypergraph; nodes 9..11 are edge-less (self-feat path).
    hyperedges = [[0, 1, 2], [2, 3], [4, 5, 6], [1, 4], [7, 8]]
    structure = {n: [e for e in hyperedges if n in e] for n in range(N)}

    targets = list(range(N)) * 4 + [0, 2, 9, 5]          # T = 52 target nodes
    ref = reference_forward(targets, structure, f_np, M)

    # bf16-streamed (default) and f32-streamed runs; both must match reference.
    out_bf16 = jax.block_until_ready(
        tmessage_passing_forward(feats, targets, structure, M))
    out_f32 = jax.block_until_ready(
        tmessage_passing_forward(feats, targets, structure, M,
                                 stream_dtype=jnp.float32))

    np.testing.assert_allclose(np.asarray(out_f32), ref, rtol=1e-5, atol=1e-5)
    np.testing.assert_allclose(np.asarray(out_bf16), ref, rtol=5e-2, atol=5e-2)
    print("KERNEL_OK")
</pallas_src>

<mosaic_0001>
module attributes {stable_mosaic.version = 11 : i64} {
  func.func @_tmp_kernel(%arg0: i32, %arg1: memref<2x3x32x128xbf16, #tpu.memory_space<vmem>>, %arg2: memref<32x128xf32, #tpu.memory_space<vmem>>, %arg3: memref<32x128xf32, #tpu.memory_space<vmem>>) attributes {dimension_semantics = [#tpu.dimension_semantics<parallel>], iteration_bounds = array<i64: 2>, scalar_prefetch = 0 : i64, scratch_operands = 0 : i64, tpu.core_type = #tpu.core_type<tc>, window_params = [{transform_indices = @transform_0, window_bounds = array<i64: 2, 3, 32, 128>}, {transform_indices = @transform_1, window_bounds = array<i64: 32, 128>}, {transform_indices = @transform_2, window_bounds = array<i64: 32, 128>}]} {
    %cst = arith.constant 0.000000e+00 : f32
    %0 = vector.broadcast %cst : f32 to vector<32x128xf32>
    %c0 = arith.constant 0 : index
    %c0_0 = arith.constant 0 : index
    %c0_1 = arith.constant 0 : index
    %c0_2 = arith.constant 0 : index
    %1 = vector.load %arg1[%c0, %c0_0, %c0_1, %c0_2] : memref<2x3x32x128xbf16, #tpu.memory_space<vmem>>, vector<1x1x32x128xbf16>
    %2 = vector.shape_cast %1 : vector<1x1x32x128xbf16> to vector<32x128xbf16>
    %3 = arith.extf %2 : vector<32x128xbf16> to vector<32x128xf32>
    %c1 = arith.constant 1 : index
    %c0_3 = arith.constant 0 : index
    %c0_4 = arith.constant 0 : index
    %c0_5 = arith.constant 0 : index
    %4 = vector.load %arg1[%c1, %c0_3, %c0_4, %c0_5] : memref<2x3x32x128xbf16, #tpu.memory_space<vmem>>, vector<1x1x32x128xbf16>
    %5 = vector.shape_cast %4 : vector<1x1x32x128xbf16> to vector<32x128xbf16>
    %6 = arith.extf %5 : vector<32x128xbf16> to vector<32x128xf32>
    %7 = arith.mulf %3, %6 : vector<32x128xf32>
    %8 = arith.addf %0, %7 : vector<32x128xf32>
    %c0_6 = arith.constant 0 : index
    %c1_7 = arith.constant 1 : index
    %c0_8 = arith.constant 0 : index
    %c0_9 = arith.constant 0 : index
    %9 = vector.load %arg1[%c0_6, %c1_7, %c0_8, %c0_9] : memref<2x3x32x128xbf16, #tpu.memory_space<vmem>>, vector<1x1x32x128xbf16>
    %10 = vector.shape_cast %9 : vector<1x1x32x128xbf16> to vector<32x128xbf16>
    %11 = arith.extf %10 : vector<32x128xbf16> to vector<32x128xf32>
    %c1_10 = arith.constant 1 : index
    %c1_11 = arith.constant 1 : index
    %c0_12 = arith.constant 0 : index
    %c0_13 = arith.constant 0 : index
    %12 = vector.load %arg1[%c1_10, %c1_11, %c0_12, %c0_13] : memref<2x3x32x128xbf16, #tpu.memory_space<vmem>>, vector<1x1x32x128xbf16>
    %13 = vector.shape_cast %12 : vector<1x1x32x128xbf16> to vector<32x128xbf16>
    %14 = arith.extf %13 : vector<32x128xbf16> to vector<32x128xf32>
    %15 = arith.mulf %11, %14 : vector<32x128xf32>
    %16 = arith.addf %8, %15 : vector<32x128xf32>
    %c0_14 = arith.constant 0 : index
    %c2 = arith.constant 2 : index
    %c0_15 = arith.constant 0 : index
    %c0_16 = arith.constant 0 : index
    %17 = vector.load %arg1[%c0_14, %c2, %c0_15, %c0_16] : memref<2x3x32x128xbf16, #tpu.memory_space<vmem>>, vector<1x1x32x128xbf16>
    %18 = vector.shape_cast %17 : vector<1x1x32x128xbf16> to vector<32x128xbf16>
    %19 = arith.extf %18 : vector<32x128xbf16> to vector<32x128xf32>
    %c1_17 = arith.constant 1 : index
    %c2_18 = arith.constant 2 : index
    %c0_19 = arith.constant 0 : index
    %c0_20 = arith.constant 0 : index
    %20 = vector.load %arg1[%c1_17, %c2_18, %c0_19, %c0_20] : memref<2x3x32x128xbf16, #tpu.memory_space<vmem>>, vector<1x1x32x128xbf16>
    %21 = vector.shape_cast %20 : vector<1x1x32x128xbf16> to vector<32x128xbf16>
    %22 = arith.extf %21 : vector<32x128xbf16> to vector<32x128xf32>
    %23 = arith.mulf %19, %22 : vector<32x128xf32>
    %24 = arith.addf %16, %23 : vector<32x128xf32>
    %c0_21 = arith.constant 0 : index
    %c0_22 = arith.constant 0 : index
    %25 = vector.load %arg2[%c0_21, %c0_22] : memref<32x128xf32, #tpu.memory_space<vmem>>, vector<32x128xf32>
    %26 = arith.addf %24, %25 : vector<32x128xf32>
    %c0_23 = arith.constant 0 : index
    %c0_24 = arith.constant 0 : index
    %27 = vector.load %arg3[%c0_23, %c0_24] : memref<32x128xf32, #tpu.memory_space<vmem>>, vector<32x128xf32>
    tpu.vector_store %arg3[%c0_23, %c0_24], %26 {strides = array<i32>} : memref<32x128xf32, #tpu.memory_space<vmem>>, vector<32x128xf32>,
    return
  }
  func.func @transform_0(%arg0: i32) -> (i32, i32, i32, i32) {
    %c0_i32 = arith.constant 0 : i32
    %c0_i32_0 = arith.constant 0 : i32
    %c0_i32_1 = arith.constant 0 : i32
    %c0_i32_2 = arith.constant 0 : i32
    return %c0_i32, %c0_i32_0, %arg0, %c0_i32_1 : i32, i32, i32, i32
  }
  func.func @transform_1(%arg0: i32) -> (i32, i32) {
    %c0_i32 = arith.constant 0 : i32
    %c0_i32_0 = arith.constant 0 : i32
    return %arg0, %c0_i32 : i32, i32
  }
  func.func @transform_2(%arg0: i32) -> (i32, i32) {
    %c0_i32 = arith.constant 0 : i32
    %c0_i32_0 = arith.constant 0 : i32
    return %arg0, %c0_i32 : i32, i32
  }
}

</mosaic_0001>

<llo_original>
// kernel: tpu_custom_call.1
$region0: #{tpu_custom_call.1}
  #allocation0 [shape = 'u32[]', space=smem, size = 0x4, offset = 0x4, fixed_abs, tag = 'smem constant byte address 0x4 - core index']
  #allocation1 [shape = 'u32[144,128]{1,0:T(1,128)}', space=vmem, size = 0x12000, scoped, tag = 'internal scratch']
  #allocation8 [shape = 's32[]', space=sflag, size = 0x4, offset = 0, fixed_abs, tag = 'sflag constant byte address 0x0 - dummy sync flag']
  %s0 = inlined_call_operand.hbm [shape: bf16[2,3,64,128], index: 0, kind: input, shape index: {}]
  %s1 = inlined_call_operand.hbm [shape: f32[64,128], index: 1, kind: input, shape index: {}]
  %s2 = inlined_call_operand.hbm [shape: f32[64,128], index: 2, kind: output, shape index: {}]
  %s3 = sld [smem:[#allocation0]]
  $region49: #{tpu_custom_call.1} parent=0
    _
  %s5 = ssub.s32 1, %s3
  %s6 = scalar_select 0, %s5, %s3
  $region1: #{tpu_custom_call.1} parent=0
    #allocation2 [shape = 'u8[98304]{0}', space=vmem, size = 0x18000, scoped, tag = 'input window, operand 0']
    #allocation3 [shape = 's32[2]{0}', space=sflag, size = 0x8, scoped, tag = 'scoped memory for tpu_custom_call.1']
    #allocation4 [shape = 's32[2]{0}', space=sflag, size = 0x8, scoped, tag = 'scoped memory for tpu_custom_call.1']
    #allocation5 [shape = 'u8[32768]{0}', space=vmem, size = 0x8000, scoped, tag = 'input window, operand 1']
    #allocation6 [shape = 's32[2]{0}', space=sflag, size = 0x8, scoped, tag = 'scoped memory for tpu_custom_call.1']
    #allocation7 [shape = 'u8[32768]{0}', space=vmem, size = 0x8000, scoped, tag = 'output window, operand 0']
    %7 = vsyncpa [#allocation3], 0
    %s8 = scalar_lea.sflag [#allocation3], 1
    %9 = vsyncpa %s8, 0
    %10 = vsyncpa [#allocation6], 0
    %s11 = scalar_lea.sflag [#allocation6], 1
    %12 = vsyncpa %s11, 0
    %13 = vsyncpa [#allocation4], 0
    %s14 = scalar_lea.sflag [#allocation4], 1
    %15 = vsyncpa %s14, 0
    loop: start=0, step=1, limit=4
    $region2: #{tpu_custom_call.1} parent=1 // loop_pre_header
      _
    $region3: #{tpu_custom_call.1} parent=1 // loop_header
      %s17 = sphi 0, %s21
      %p18 = scmp.ge.s32.totalorder %s17, 4
      %s27 = sphi 0, %s29
      %s30 = sphi 0, %s27
      %s31 = sphi 0, %s30
      %s47 = sphi 0, %s31
      %s53 = sphi 0, %s55
      %s56 = sphi 0, %s53
      %s57 = sphi 0, %s56
      %s73 = sphi 0, %s57
      %s79 = sphi 0, %s81
      %s82 = sphi 0, %s79
      %s83 = sphi 0, %s82
      %s99 = sphi 0, %s83
    $region4: #{tpu_custom_call.1} parent=1 // loop_header_branch
      %20 = sbr.rel (%p18) target = $region8
    $region5: #{tpu_custom_call.1} parent=1 // loop_body
      %s22 = ssub.s32 %s17, 1
      %s23 = ssub.s32 %s17, 2
      %s24 = sadd.s32 %s17, 1
      %s25 = ssub.s32 %s17, %s24
      %p26 = scmp.eq.s32.totalorder %s25, 0
      %s28 = sadd.s32 %s27, 1
      %s29 = scalar_select %p26, %s27, %s28
      %p32 = pneg %p26
      %p33 = scmp.eq.s32.totalorder %s17, 1
      %p34 = por %p32, %p33
      %p35 = scmp.ne.s32.totalorder %s27, %s30
      %p36 = scmp.eq.s32.totalorder %s17, 0
      %p37 = por %p35, %p36
      %p38 = scmp.ne.s32.totalorder %s27, %s30
      %p39 = scmp.eq.s32.totalorder %s22, 1
      %p40 = por %p38, %p39
      %p41 = scmp.ne.s32.totalorder %s30, %s31
      %p42 = scmp.eq.s32.totalorder %s22, 0
      %p43 = por %p41, %p42
      %p44 = scmp.ne.s32.totalorder %s30, %s31
      %p45 = scmp.eq.s32.totalorder %s23, 1
      %p46 = por %p44, %p45
      %p48 = scmp.ne.s32.totalorder %s31, %s47
      %p49 = scmp.eq.s32.totalorder %s23, 0
      %p50 = por %p48, %p49
      %s51 = ssub.s32 %s17, %s24
      %p52 = scmp.eq.s32.totalorder %s51, 0
      %s54 = sadd.s32 %s53, 1
      %s55 = scalar_select %p52, %s53, %s54
      %p58 = pneg %p52
      %p59 = scmp.eq.s32.totalorder %s17, 1
      %p60 = por %p58, %p59
      %p61 = scmp.ne.s32.totalorder %s53, %s56
      %p62 = scmp.eq.s32.totalorder %s17, 0
      %p63 = por %p61, %p62
      %p64 = scmp.ne.s32.totalorder %s53, %s56
      %p65 = scmp.eq.s32.totalorder %s22, 1
      %p66 = por %p64, %p65
      %p67 = scmp.ne.s32.totalorder %s56, %s57
      %p68 = scmp.eq.s32.totalorder %s22, 0
      %p69 = por %p67, %p68
      %p70 = scmp.ne.s32.totalorder %s56, %s57
      %p71 = scmp.eq.s32.totalorder %s23, 1
      %p72 = por %p70, %p71
      %p74 = scmp.ne.s32.totalorder %s57, %s73
      %p75 = scmp.eq.s32.totalorder %s23, 0
      %p76 = por %p74, %p75
      %s77 = ssub.s32 %s17, %s24
      %p78 = scmp.eq.s32.totalorder %s77, 0
      %s80 = sadd.s32 %s79, 1
      %s81 = scalar_select %p78, %s79, %s80
      %p84 = pneg %p78
      %p85 = scmp.eq.s32.totalorder %s17, 1
      %p86 = por %p84, %p85
      %p87 = scmp.ne.s32.totalorder %s79, %s82
      %p88 = scmp.eq.s32.totalorder %s17, 0
      %p89 = por %p87, %p88
      %p90 = scmp.ne.s32.totalorder %s79, %s82
      %p91 = scmp.eq.s32.totalorder %s22, 1
      %p92 = por %p90, %p91
      %p93 = scmp.ne.s32.totalorder %s82, %s83
      %p94 = scmp.eq.s32.totalorder %s22, 0
      %p95 = por %p93, %p94
      %p96 = scmp.ne.s32.totalorder %s82, %s83
      %p97 = scmp.eq.s32.totalorder %s23, 1
      %p98 = por %p96, %p97
      %p100 = scmp.ne.s32.totalorder %s83, %s99
      %p101 = scmp.eq.s32.totalorder %s23, 0
      %p102 = por %p100, %p101
      %p103 = scmp.le.s32.totalorder 1, %s17
      %p104 = scmp.lt.s32.totalorder %s17, 3
      %p105 = pnand %p103, %p104
      %p106 = pneg %p105
      // Predicated region
      $region9: #{tpu_custom_call.1} parent=5 // pred_check
        _
      $region10: #{tpu_custom_call.1} parent=5 // pred_check_branch
        %108 = sbr.rel (%p105) target = $region12
      $region11: #{tpu_custom_call.1} parent=5 // pred_region
        %s109 = ssub.s32 %s17, 1
      $region12: #{tpu_custom_call.1} parent=5 // pred_fallthru
        _
      %p110 = scmp.lt.s32.totalorder %s17, 2
      // Predicated region
      $region13: #{tpu_custom_call.1} parent=5 // pred_check
        %p111 = pneg %p110
      $region14: #{tpu_custom_call.1} parent=5 // pred_check_branch
        %113 = sbr.rel (%p111) target = $region16
      $region15: #{tpu_custom_call.1} parent=5 // pred_region
        // Predicated region
        $region17: #{tpu_custom_call.1} parent=15 // pred_check
          %p114 = pneg %p37
        $region18: #{tpu_custom_call.1} parent=15 // pred_check_branch
          %116 = sbr.rel (%p114) target = $region20
        $region19: #{tpu_custom_call.1} parent=15 // pred_region
          #allocation9 [shape = 'u32[6]{0}', space=smem, size = 0x18, scoped, tag = 'DMA stride descriptor']
          %s117 = sand.u32 %s27, 1
          %s118 = scalar_lea.sflag [#allocation3], %s117
          %s119 = sand.u32 %s27, 1
          %s120 = smul.addr %s119, 96
          %s121 = scalar_lea.vmem [#allocation2], %s120
          %s122 = smul.u32 4, %s17
          %s124 = ssub.s32 1536, 1536
          %125 = vsyncadd %s118, %s124
          %s126 = smul.addr %s122, 64
          %s127 = scalar_lea.hbm %s0, %s126
          %s129 = sshll.u32 1, 14
          %s130 = sxor.u32 4294967295, %s129
          %s132 = sld [smem:[#allocation0]]
          %s133 = sadd.s32 2, %s132
          %s135 = sshll.u32 7, 26
          %s136 = sxor.u32 4294967295, %s135
          %s137 = sand.u32 0, %s136
          %s138 = sshll.u32 %s133, 26
          %s139 = sor.u32 %s137, %s138
          %s140 = sshll.u32 %s121, 4
          %s141 = int_to_ptr.vmem [resolvable:$true] %s140
          %147 = sst [smem:[#allocation9]] 512
          %s148 = scalar_lea.smem [#allocation9], 1
          %149 = sst [smem:[%s148]] 256
          %s150 = scalar_lea.smem [#allocation9], 2
          %151 = sst [smem:[%s150]] 4
          %s152 = scalar_lea.smem [#allocation9], 3
          %153 = sst [smem:[%s152]] 64
          %s154 = scalar_lea.smem [#allocation9], 4
          %155 = sst [smem:[%s154]] 64
          %s156 = scalar_lea.smem [#allocation9], 5
          %157 = sst [smem:[%s156]] 4
          %159 = dma.general %s127, 1536, %s141, %s118, [#allocation8], [#allocation9], %s139, 0
        $region20: #{tpu_custom_call.1} parent=15 // pred_fallthru
          _
        // Predicated region
        $region21: #{tpu_custom_call.1} parent=15 // pred_check
          %p160 = pneg %p63
        $region22: #{tpu_custom_call.1} parent=15 // pred_check_branch
          %162 = sbr.rel (%p160) target = $region24
        $region23: #{tpu_custom_call.1} parent=15 // pred_region
          %s163 = sand.u32 %s53, 1
          %s164 = scalar_lea.sflag [#allocation6], %s163
          %s165 = sand.u32 %s53, 1
          %s166 = smul.addr %s165, 32
          %s167 = scalar_lea.vmem [#allocation5], %s166
          %s168 = smul.u32 4, %s17
          %s170 = ssub.s32 512, 512
          %171 = vsyncadd %s164, %s170
          %s172 = smul.addr %s168, 128
          %s173 = scalar_lea.hbm %s1, %s172
          %s174 = sshll.u32 %s167, 4
          %s175 = int_to_ptr.vmem [resolvable:$true] %s174
          %180 = dma.hbm_to_vmem [thread:$0]  %s173, 512, %s175, %s164, 128, 128, 8
        $region24: #{tpu_custom_call.1} parent=15 // pred_fallthru
          _
      $region16: #{tpu_custom_call.1} parent=5 // pred_fallthru
        _
      %p181 = scmp.le.s32.totalorder 1, %s17
      %p182 = scmp.lt.s32.totalorder %s17, 3
      %p183 = pnand %p181, %p182
      %p184 = pneg %p183
      // Predicated region
      $region25: #{tpu_custom_call.1} parent=5 // pred_check
        _
      $region26: #{tpu_custom_call.1} parent=5 // pred_check_branch
        %186 = sbr.rel (%p183) target = $region28
      $region27: #{tpu_custom_call.1} parent=5 // pred_region
        %s187 = ssub.s32 %s17, 1
        %s188 = sand.u32 %s30, 1
        %s189 = scalar_lea.sflag [#allocation3], %s188
        %s190 = sand.u32 %s30, 1
        %s191 = smul.addr %s190, 96
        %s192 = scalar_lea.vmem [#allocation2], %s191
        // Predicated region
        $region29: #{tpu_custom_call.1} parent=27 // pred_check
          %p193 = pneg %p43
        $region30: #{tpu_custom_call.1} parent=27 // pred_check_branch
          %195 = sbr.rel (%p193) target = $region32
        $region31: #{tpu_custom_call.1} parent=27 // pred_region
          %196 = dma.done %s189, 1536
        $region32: #{tpu_custom_call.1} parent=27 // pred_fallthru
          _
        %s197 = sand.u32 %s56, 1
        %s198 = scalar_lea.sflag [#allocation6], %s197
        %s199 = sand.u32 %s56, 1
        %s200 = smul.addr %s199, 32
        %s201 = scalar_lea.vmem [#allocation5], %s200
        // Predicated region
        $region33: #{tpu_custom_call.1} parent=27 // pred_check
          %p202 = pneg %p69
        $region34: #{tpu_custom_call.1} parent=27 // pred_check_branch
          %204 = sbr.rel (%p202) target = $region36
        $region35: #{tpu_custom_call.1} parent=27 // pred_region
          %205 = dma.done %s198, 512
        $region36: #{tpu_custom_call.1} parent=27 // pred_fallthru
          _
        %s206 = sand.u32 %s30, 1
        %s207 = scalar_lea.sflag [#allocation3], %s206
        %s208 = sand.u32 %s30, 1
        %s209 = smul.addr %s208, 96
        %s210 = scalar_lea.vmem [#allocation2], %s209
        %p211 = pneg %p43
        %p212 = pneg %p40
        %s213 = sand.u32 %s56, 1
        %s214 = scalar_lea.sflag [#allocation6], %s213
        %s215 = sand.u32 %s56, 1
        %s216 = smul.addr %s215, 32
        %s217 = scalar_lea.vmem [#allocation5], %s216
        %p218 = pneg %p69
        %p219 = pneg %p66
        %p220 = pneg %p95
        %p221 = pneg %p92
        %s222 = sand.u32 %s82, 1
        %s223 = scalar_lea.sflag [#allocation4], %s222
        %s224 = sand.u32 %s82, 1
        %s225 = smul.addr %s224, 32
        %s226 = scalar_lea.vmem [#allocation7], %s225
        %s227 = smul.u32 4, %s22
        %s228 = smul.u32 4, %s22
        %s229 = smul.u32 4, %s22
        %v230 = vld [vmem:[%s192] sm:$0xf]
        %v231 = vld [vmem:[%s192 + $0x4] sm:$0xf]
        %v232 = vld [vmem:[%s192 + $0x8] sm:$0xf]
        %v233 = vld [vmem:[%s192 + $0xc] sm:$0xf]
        %v234 = vunpack.c.l.bf16 %v230
        %v235 = vunpack.c.l.bf16 %v231
        %v236 = vunpack.c.l.bf16 %v232
        %v237 = vunpack.c.l.bf16 %v233
        %s238 = scalar_lea.vmem %s192, 48 [#allocation2]
        %v239 = vld [vmem:[%s238] sm:$0xf]
        %v240 = vld [vmem:[%s238 + $0x4] sm:$0xf]
        %v241 = vld [vmem:[%s238 + $0x8] sm:$0xf]
        %v242 = vld [vmem:[%s238 + $0xc] sm:$0xf]
        %v243 = vunpack.c.l.bf16 %v239
        %v244 = vunpack.c.l.bf16 %v240
        %v245 = vunpack.c.l.bf16 %v241
        %v246 = vunpack.c.l.bf16 %v242
        %v247 = vmul.f32 %v234, %v243
        %v248 = vmul.f32 %v235, %v244
        %v249 = vmul.f32 %v236, %v245
        %v250 = vmul.f32 %v237, %v246
        %v251 = vadd.f32 %v247, 0.0
        %v252 = vadd.f32 %v248, 0.0
        %v253 = vadd.f32 %v249, 0.0
        %v254 = vadd.f32 %v250, 0.0
        %s255 = scalar_lea.vmem %s192, 16 [#allocation2]
        %v256 = vld [vmem:[%s255] sm:$0xf]
        %v257 = vld [vmem:[%s255 + $0x4] sm:$0xf]
        %v258 = vld [vmem:[%s255 + $0x8] sm:$0xf]
        %v259 = vld [vmem:[%s255 + $0xc] sm:$0xf]
        %v260 = vunpack.c.l.bf16 %v256
        %v261 = vunpack.c.l.bf16 %v257
        %v262 = vunpack.c.l.bf16 %v258
        %v263 = vunpack.c.l.bf16 %v259
        %s264 = scalar_lea.vmem %s192, 64 [#allocation2]
        %v265 = vld [vmem:[%s264] sm:$0xf]
        %v266 = vld [vmem:[%s264 + $0x4] sm:$0xf]
        %v267 = vld [vmem:[%s264 + $0x8] sm:$0xf]
        %v268 = vld [vmem:[%s264 + $0xc] sm:$0xf]
        %v269 = vunpack.c.l.bf16 %v265
        %v270 = vunpack.c.l.bf16 %v266
        %v271 = vunpack.c.l.bf16 %v267
        %v272 = vunpack.c.l.bf16 %v268
        %v273 = vmul.f32 %v260, %v269
        %v274 = vmul.f32 %v261, %v270
        %v275 = vmul.f32 %v262, %v271
        %v276 = vmul.f32 %v263, %v272
        %v277 = vadd.f32 %v251, %v273
        %v278 = vadd.f32 %v252, %v274
        %v279 = vadd.f32 %v253, %v275
        %v280 = vadd.f32 %v254, %v276
        %s281 = scalar_lea.vmem %s192, 32 [#allocation2]
        %v282 = vld [vmem:[%s281] sm:$0xf]
        %v283 = vld [vmem:[%s281 + $0x4] sm:$0xf]
        %v284 = vld [vmem:[%s281 + $0x8] sm:$0xf]
        %v285 = vld [vmem:[%s281 + $0xc] sm:$0xf]
        %v286 = vunpack.c.l.bf16 %v282
        %v287 = vunpack.c.l.bf16 %v283
        %v288 = vunpack.c.l.bf16 %v284
        %v289 = vunpack.c.l.bf16 %v285
        %s290 = scalar_lea.vmem %s192, 80 [#allocation2]
        %v291 = vld [vmem:[%s290] sm:$0xf]
        %v292 = vld [vmem:[%s290 + $0x4] sm:$0xf]
        %v293 = vld [vmem:[%s290 + $0x8] sm:$0xf]
        %v294 = vld [vmem:[%s290 + $0xc] sm:$0xf]
        %v295 = vunpack.c.l.bf16 %v291
        %v296 = vunpack.c.l.bf16 %v292
        %v297 = vunpack.c.l.bf16 %v293
        %v298 = vunpack.c.l.bf16 %v294
        %v299 = vmul.f32 %v286, %v295
        %v300 = vmul.f32 %v287, %v296
        %v301 = vmul.f32 %v288, %v297
        %v302 = vmul.f32 %v289, %v298
        %v303 = vadd.f32 %v277, %v299
        %v304 = vadd.f32 %v278, %v300
        %v305 = vadd.f32 %v279, %v301
        %v306 = vadd.f32 %v280, %v302
        %v307 = vld [vmem:[%s201] sm:$0xff]
        %v308 = vld [vmem:[%s201 + $0x8] sm:$0xff]
        %v309 = vld [vmem:[%s201 + $0x10] sm:$0xff]
        %v310 = vld [vmem:[%s201 + $0x18] sm:$0xff]
        %v311 = vadd.f32 %v303, %v307
        %v312 = vadd.f32 %v304, %v308
        %v313 = vadd.f32 %v305, %v309
        %v314 = vadd.f32 %v306, %v310
        %315 = vst [vmem:[%s226] sm:$0xff] %v311
        %316 = vst [vmem:[%s226 + $0x8] sm:$0xff] %v312
        %317 = vst [vmem:[%s226 + $0x10] sm:$0xff] %v313
        %318 = vst [vmem:[%s226 + $0x18] sm:$0xff] %v314
        %s319 = sand.u32 %s82, 1
        %s320 = scalar_lea.sflag [#allocation4], %s319
        %s321 = sand.u32 %s82, 1
        %s322 = smul.addr %s321, 32
        %s323 = scalar_lea.vmem [#allocation7], %s322
        // Predicated region
        $region37: #{tpu_custom_call.1} parent=27 // pred_check
          %p324 = pneg %p92
        $region38: #{tpu_custom_call.1} parent=27 // pred_check_branch
          %326 = sbr.rel (%p324) target = $region40
        $region39: #{tpu_custom_call.1} parent=27 // pred_region
          %s327 = smul.u32 4, %s22
          %s329 = ssub.s32 512, 512
          %330 = vsyncadd %s320, %s329
          %s331 = smul.addr %s327, 128
          %s332 = scalar_lea.hbm %s2, %s331
          %s333 = sshll.u32 %s323, 4
          %s334 = int_to_ptr.vmem [resolvable:$true] %s333
          %339 = dma.vmem_to_hbm [thread:$0]  %s334, 512, %s332, %s320, 128, 128, 8
        $region40: #{tpu_custom_call.1} parent=27 // pred_fallthru
          _
      $region28: #{tpu_custom_call.1} parent=5 // pred_fallthru
        _
      %p340 = scmp.le.s32.totalorder 2, %s17
      // Predicated region
      $region41: #{tpu_custom_call.1} parent=5 // pred_check
        %p341 = pneg %p340
      $region42: #{tpu_custom_call.1} parent=5 // pred_check_branch
        %343 = sbr.rel (%p341) target = $region44
      $region43: #{tpu_custom_call.1} parent=5 // pred_region
        %s344 = ssub.s32 %s17, 2
        // Predicated region
        $region45: #{tpu_custom_call.1} parent=43 // pred_check
          %p345 = pneg %p98
        $region46: #{tpu_custom_call.1} parent=43 // pred_check_branch
          %347 = sbr.rel (%p345) target = $region48
        $region47: #{tpu_custom_call.1} parent=43 // pred_region
          %s348 = sand.u32 %s83, 1
          %s349 = scalar_lea.sflag [#allocation4], %s348
          %s350 = sand.u32 %s83, 1
          %s351 = smul.addr %s350, 32
          %s352 = scalar_lea.vmem [#allocation7], %s351
          %353 = dma.done %s349, 512
        $region48: #{tpu_custom_call.1} parent=43 // pred_fallthru
          _
      $region44: #{tpu_custom_call.1} parent=5 // pred_fallthru
        _
    $region6: #{tpu_custom_call.1} parent=1 // loop_footer
      %s21 = sadd.s32 1, %s17
    $region7: #{tpu_custom_call.1} parent=1 // loop_footer_branch
      %16 = sbr.rel target = $region3
    $region8: #{tpu_custom_call.1} parent=1 // loop_exit
      _
    %354 = vsyncpa [#allocation3], 1
    %s355 = scalar_lea.sflag [#allocation3], 1
    %356 = vsyncpa %s355, 1
    %357 = vsyncpa [#allocation6], 1
    %s358 = scalar_lea.sflag [#allocation6], 1
    %359 = vsyncpa %s358, 1
    %360 = vsyncpa [#allocation4], 1
    %s361 = scalar_lea.sflag [#allocation4], 1
    %362 = vsyncpa %s361, 1

</llo_original>
